<compile_context>
chip_gen: v6e
topology: v6e:2x2x1
jax: 0.10.0
libtpu: 0.0.40
codegen_flags: <defaults>
</compile_context>

<pallas_src>
import functools

import jax
import jax.numpy as jnp
from jax.experimental import pallas as pl
from jax.experimental.pallas import tpu as pltpu

# CartPole-v0 defaults implied by the original script (env.unwrapped)
N_STATES = 4      # env.observation_space.shape[0]
N_ACTIONS = 2     # env.action_space.n
HIDDEN = 50

HIDDEN_PAD = 128  # hidden (lane) dim padded to one full vreg lane width
SUBLANE = 8       # f32 sublane count: batch block must be a multiple of this


def _net_kernel(x_ref, w1_ref, b1_ref, w2_ref, b2_ref, out_ref):
    """Fused MLP forward on one (bb, N_STATES) batch tile:
       out = relu(x @ W1 + b1) @ W2 + b2.
    x/out stay at native widths (4 / 2); only the hidden dim is 128 wide."""
    x = x_ref[...]                                      # (bb, 4) f32
    h = jnp.dot(x, w1_ref[...],
                preferred_element_type=jnp.float32)     # (bb, 128) on MXU
    h = jnp.maximum(h + b1_ref[...], 0.0)               # bias + ReLU on VPU
    o = jnp.dot(h, w2_ref[...],
                preferred_element_type=jnp.float32)     # (bb, 2) on MXU
    out_ref[...] = o + b2_ref[...]                      # narrow (masked) store


def _round_up(v, m):
    return ((v + m - 1) // m) * m


@functools.partial(jax.jit, static_argnames=("block_b",))
def net_forward(x, w1, b1, w2, b2, *, block_b=1024):
    """x: (B, N_STATES) f32. Weights stored as [in, out] (x @ W + b layout).
    Returns (B, N_ACTIONS) f32."""
    B = x.shape[0]

    # Batch block: multiple of 8 sublanes, covers the whole batch up to the
    # cap so a typical replay batch is a single grid step.
    cap = max(SUBLANE, _round_up(block_b, SUBLANE))
    bb = min(cap, _round_up(B, SUBLANE))
    b_pad = _round_up(B, bb)
    grid = (b_pad // bb,)

    xf = x.astype(jnp.float32)
    if b_pad != B:
        xf = jnp.pad(xf, ((0, b_pad - B), (0, 0)))       # rows only, cols native

    # Pad ONLY the hidden dim to 128; x-features and actions stay native.
    w1p = jnp.pad(w1.astype(jnp.float32),
                  ((0, 0), (0, HIDDEN_PAD - HIDDEN)))    # (4, 128)
    b1p = jnp.pad(b1.astype(jnp.float32).reshape(1, HIDDEN),
                  ((0, 0), (0, HIDDEN_PAD - HIDDEN)))    # (1, 128)
    w2p = jnp.pad(w2.astype(jnp.float32),
                  ((0, HIDDEN_PAD - HIDDEN), (0, 0)))    # (128, 2)
    b2p = b2.astype(jnp.float32).reshape(1, N_ACTIONS)   # (1, 2)

    out = pl.pallas_call(
        _net_kernel,
        out_shape=jax.ShapeDtypeStruct((b_pad, N_ACTIONS), jnp.float32),
        grid=grid,
        in_specs=[
            pl.BlockSpec((bb, N_STATES), lambda i: (i, 0)),        # x: batch-tiled, native width
            pl.BlockSpec((N_STATES, HIDDEN_PAD), lambda i: (0, 0)),  # W1: resident, ~4 KiB
            pl.BlockSpec((1, HIDDEN_PAD), lambda i: (0, 0)),         # b1: resident
            pl.BlockSpec((HIDDEN_PAD, N_ACTIONS), lambda i: (0, 0)), # W2: resident
            pl.BlockSpec((1, N_ACTIONS), lambda i: (0, 0)),          # b2: resident
        ],
        out_specs=pl.BlockSpec((bb, N_ACTIONS), lambda i: (i, 0)),   # native-width output
        compiler_params=pltpu.CompilerParams(
            dimension_semantics=("parallel",)),          # megacore sharding on v7x
    )(xf, w1p, b1p, w2p, b2p)

    return out if b_pad == B else out[:B]


def init_params(key):
    """Deterministic synthetic params matching Net.__init__ shapes.
    Weights ~ N(0, 0.1) as in `weight.data.normal_(0, 0.1)`; biases small
    uniform (PyTorch default Linear bias init)."""
    k1, k2, k3, k4 = jax.random.split(key, 4)
    # Stored as [in, out] (transpose of PyTorch's [out, in]) for x @ W layout.
    w1 = 0.1 * jax.random.normal(k1, (N_STATES, HIDDEN), dtype=jnp.float32)
    w2 = 0.1 * jax.random.normal(k2, (HIDDEN, N_ACTIONS), dtype=jnp.float32)
    b1 = jax.random.uniform(k3, (1, HIDDEN), dtype=jnp.float32,
                            minval=-1.0 / jnp.sqrt(N_STATES),
                            maxval=1.0 / jnp.sqrt(N_STATES))
    b2 = jax.random.uniform(k4, (1, N_ACTIONS), dtype=jnp.float32,
                            minval=-1.0 / jnp.sqrt(HIDDEN),
                            maxval=1.0 / jnp.sqrt(HIDDEN))
    return w1, b1, w2, b2


if __name__ == "__main__":
    key = jax.random.PRNGKey(0)
    k_x, k_xb, k_p = jax.random.split(key, 3)

    w1, b1, w2, b2 = init_params(k_p)

    # Small inference-style batch (per-step action selection). In a real DQN
    # loop this path is better served by plain XLA; exercised here anyway.
    B = 2
    x = jax.random.normal(k_x, (B, N_STATES), dtype=jnp.float32)
    actions_value = net_forward(x, w1, b1, w2, b2)
    jax.block_until_ready(actions_value)

    ref = jnp.maximum(x @ w1 + b1, 0.0) @ w2 + b2
    assert actions_value.shape == (B, N_ACTIONS)
    assert jnp.allclose(actions_value, ref, atol=1e-5, rtol=1e-5)

    # Replay-minibatch-style batch: single grid step, resident weights.
    Bt = 512
    xb = jax.random.normal(k_xb, (Bt, N_STATES), dtype=jnp.float32)
    qb = net_forward(xb, w1, b1, w2, b2)
    jax.block_until_ready(qb)

    refb = jnp.maximum(xb @ w1 + b1, 0.0) @ w2 + b2
    assert qb.shape == (Bt, N_ACTIONS)
    assert jnp.allclose(qb, refb, atol=1e-5, rtol=1e-5)

    print("KERNEL_OK")
</pallas_src>

<mosaic_0001>
module attributes {stable_mosaic.version = 11 : i64} {
  func.func @_net_kernel(%arg0: i32, %arg1: memref<8x4xf32, #tpu.memory_space<vmem>>, %arg2: memref<4x128xf32, #tpu.memory_space<vmem>>, %arg3: memref<1x128xf32, #tpu.memory_space<vmem>>, %arg4: memref<128x2xf32, #tpu.memory_space<vmem>>, %arg5: memref<1x2xf32, #tpu.memory_space<vmem>>, %arg6: memref<8x2xf32, #tpu.memory_space<vmem>>) attributes {dimension_semantics = [#tpu.dimension_semantics<parallel>], iteration_bounds = array<i64: 1>, scalar_prefetch = 0 : i64, scratch_operands = 0 : i64, tpu.core_type = #tpu.core_type<tc>, window_params = [{transform_indices = @transform_0, window_bounds = array<i64: 8, 4>}, {pipeline_mode = #tpu.pipeline_mode<synchronous>, transform_indices = @transform_1, window_bounds = array<i64: 4, 128>}, {pipeline_mode = #tpu.pipeline_mode<synchronous>, transform_indices = @transform_2, window_bounds = array<i64: 1, 128>}, {pipeline_mode = #tpu.pipeline_mode<synchronous>, transform_indices = @transform_3, window_bounds = array<i64: 128, 2>}, {pipeline_mode = #tpu.pipeline_mode<synchronous>, transform_indices = @transform_4, window_bounds = array<i64: 1, 2>}, {transform_indices = @transform_5, window_bounds = array<i64: 8, 2>}]} {
    %c0 = arith.constant 0 : index
    %c0_0 = arith.constant 0 : index
    %0 = vector.load %arg1[%c0, %c0_0] : memref<8x4xf32, #tpu.memory_space<vmem>>, vector<8x4xf32>
    %c0_1 = arith.constant 0 : index
    %c0_2 = arith.constant 0 : index
    %1 = vector.load %arg2[%c0_1, %c0_2] : memref<4x128xf32, #tpu.memory_space<vmem>>, vector<4x128xf32>
    %cst = arith.constant dense<0.000000e+00> : vector<8x128xf32>
    %2 = tpu.matmul %0, %1, %cst {dimension_numbers = #tpu.dot_dimension_numbers<[1], [0], [0], [1], [0, 0, 1, 1], [], []>} : vector<8x4xf32>, vector<4x128xf32>, vector<8x128xf32> -> vector<8x128xf32>
    %c0_3 = arith.constant 0 : index
    %c0_4 = arith.constant 0 : index
    %3 = vector.load %arg3[%c0_3, %c0_4] : memref<1x128xf32, #tpu.memory_space<vmem>>, vector<1x128xf32>
    %4 = vector.broadcast %3 : vector<1x128xf32> to vector<8x128xf32>
    %5 = arith.addf %2, %4 : vector<8x128xf32>
    %cst_5 = arith.constant 0.000000e+00 : f32
    %6 = vector.broadcast %cst_5 : f32 to vector<8x128xf32>
    %7 = arith.maximumf %5, %6 : vector<8x128xf32>
    %c0_6 = arith.constant 0 : index
    %c0_7 = arith.constant 0 : index
    %8 = vector.load %arg4[%c0_6, %c0_7] : memref<128x2xf32, #tpu.memory_space<vmem>>, vector<128x2xf32>
    %cst_8 = arith.constant dense<0.000000e+00> : vector<8x2xf32>
    %9 = tpu.matmul %7, %8, %cst_8 {dimension_numbers = #tpu.dot_dimension_numbers<[1], [0], [0], [1], [0, 0, 1, 1], [], []>} : vector<8x128xf32>, vector<128x2xf32>, vector<8x2xf32> -> vector<8x2xf32>
    %c0_9 = arith.constant 0 : index
    %c0_10 = arith.constant 0 : index
    %10 = vector.load %arg5[%c0_9, %c0_10] : memref<1x2xf32, #tpu.memory_space<vmem>>, vector<1x2xf32>
    %11 = vector.broadcast %10 : vector<1x2xf32> to vector<8x2xf32>
    %12 = arith.addf %9, %11 : vector<8x2xf32>
    %c0_11 = arith.constant 0 : index
    %c0_12 = arith.constant 0 : index
    %13 = vector.load %arg6[%c0_11, %c0_12] : memref<8x2xf32, #tpu.memory_space<vmem>>, vector<8x2xf32>
    tpu.vector_store %arg6[%c0_11, %c0_12], %12 {strides = array<i32>} : memref<8x2xf32, #tpu.memory_space<vmem>>, vector<8x2xf32>,
    return
  }
  func.func @transform_0(%arg0: i32) -> (i32, i32) {
    %c0_i32 = arith.constant 0 : i32
    %c0_i32_0 = arith.constant 0 : i32
    return %arg0, %c0_i32 : i32, i32
  }
  func.func @transform_1(%arg0: i32) -> (i32, i32) {
    %c0_i32 = arith.constant 0 : i32
    %c0_i32_0 = arith.constant 0 : i32
    %c0_i32_1 = arith.constant 0 : i32
    return %c0_i32, %c0_i32_0 : i32, i32
  }
  func.func @transform_2(%arg0: i32) -> (i32, i32) {
    %c0_i32 = arith.constant 0 : i32
    %c0_i32_0 = arith.constant 0 : i32
    %c0_i32_1 = arith.constant 0 : i32
    return %c0_i32, %c0_i32_0 : i32, i32
  }
  func.func @transform_3(%arg0: i32) -> (i32, i32) {
    %c0_i32 = arith.constant 0 : i32
    %c0_i32_0 = arith.constant 0 : i32
    %c0_i32_1 = arith.constant 0 : i32
    return %c0_i32, %c0_i32_0 : i32, i32
  }
  func.func @transform_4(%arg0: i32) -> (i32, i32) {
    %c0_i32 = arith.constant 0 : i32
    %c0_i32_0 = arith.constant 0 : i32
    %c0_i32_1 = arith.constant 0 : i32
    return %c0_i32, %c0_i32_0 : i32, i32
  }
  func.func @transform_5(%arg0: i32) -> (i32, i32) {
    %c0_i32 = arith.constant 0 : i32
    %c0_i32_0 = arith.constant 0 : i32
    return %arg0, %c0_i32 : i32, i32
  }
}

</mosaic_0001>

<llo_original>
// kernel: net_forward.1
$region0: #{net_forward.1}
  #allocation0 [shape = 'u32[]', space=smem, size = 0x4, offset = 0x4, fixed_abs, tag = 'smem constant byte address 0x4 - core index']
  #allocation1 [shape = 'u32[144,128]{1,0:T(1,128)}', space=vmem, size = 0x12000, scoped, tag = 'internal scratch']
  %s0 = inlined_call_operand.vmem [shape: f32[8,4], index: 0, kind: input, shape index: {}]
  %s1 = inlined_call_operand.vmem [shape: f32[4,128], index: 1, kind: input, shape index: {}]
  %s2 = inlined_call_operand.vmem [shape: f32[1,128], index: 2, kind: input, shape index: {}]
  %s3 = inlined_call_operand.vmem [shape: f32[128,2], index: 3, kind: input, shape index: {}]
  %s4 = inlined_call_operand.vmem [shape: f32[1,2], index: 4, kind: input, shape index: {}]
  %s5 = inlined_call_operand.vmem [shape: f32[8,2], index: 5, kind: output, shape index: {}]
  %s6 = sld [smem:[#allocation0]]
  $region30: #{net_forward.1} parent=0
    _
  %s8 = ssub.s32 1, %s6
  %s9 = scalar_select 0, %s8, %s6
  // Predicated region
  $region2: #{net_forward.1} parent=0 // pred_check
    _
  $region3: #{net_forward.1} parent=0 // pred_check_branch
    %11 = sbr.rel (0) target = $region5
  $region4: #{net_forward.1} parent=0 // pred_region
    _
  $region5: #{net_forward.1} parent=0 // pred_fallthru
    _
  // Predicated region
  $region6: #{net_forward.1} parent=0 // pred_check
    _
  $region7: #{net_forward.1} parent=0 // pred_check_branch
    %13 = sbr.rel (0) target = $region9
  $region8: #{net_forward.1} parent=0 // pred_region
    _
  $region9: #{net_forward.1} parent=0 // pred_fallthru
    _
  // Predicated region
  $region10: #{net_forward.1} parent=0 // pred_check
    _
  $region11: #{net_forward.1} parent=0 // pred_check_branch
    %15 = sbr.rel (0) target = $region13
  $region12: #{net_forward.1} parent=0 // pred_region
    _
  $region13: #{net_forward.1} parent=0 // pred_fallthru
    _
  // Predicated region
  $region14: #{net_forward.1} parent=0 // pred_check
    _
  $region15: #{net_forward.1} parent=0 // pred_check_branch
    %17 = sbr.rel (0) target = $region17
  $region16: #{net_forward.1} parent=0 // pred_region
    _
  $region17: #{net_forward.1} parent=0 // pred_fallthru
    _
  // Predicated region
  $region18: #{net_forward.1} parent=0 // pred_check
    _
  $region19: #{net_forward.1} parent=0 // pred_check_branch
    %19 = sbr.rel (0) target = $region21
  $region20: #{net_forward.1} parent=0 // pred_region
    _
  $region21: #{net_forward.1} parent=0 // pred_fallthru
    _
  %v20 = vld [vmem:[%s0] sm:$0xff]
  %v21 = vld [vmem:[%s1] sm:$0xf]
  %v22 = vld [vmem:[%s2] sm:$0x1]
  %v24 = vlaneseq
  %v25 = vshrl.u32 %v24, 7
  %v26 = vsub.s32 0, %v25
  %v27 = vrot.slane %v22, %v26
  %vm29 = vcmask 31744
  %v31 = vsel %vm29, %v20, 0
  %vm33 = vcmask 1043456
  %v35 = vsel %vm33, %v21, 0
  %37 = vmatprep.subr.mxu0 0.0
  %38 = vmatpush1.msra.mxu0 0.0
  %39 = vmatprep.subr.mxu0 0.0
  %40 = vmatpush1.msra.mxu0 0.0
  %41 = vmatprep.subr.mxu0 0.0
  %42 = vmatpush1.msra.mxu0 0.0
  %43 = vmatprep.subr.mxu0 0.0
  %44 = vmatpush1.msra.mxu0 0.0
  %45 = vmatprep.subr.mxu0 0.0
  %46 = vmatpush1.msra.mxu0 0.0
  %47 = vmatprep.subr.mxu0 0.0
  %48 = vmatpush1.msra.mxu0 0.0
  %49 = vmatprep.subr.mxu0 0.0
  %50 = vmatpush1.msra.mxu0 0.0
  %51 = vmatprep.subr.mxu0 0.0
  %52 = vmatpush1.msra.mxu0 0.0
  %53 = vmatprep.subr.mxu0 0.0
  %54 = vmatpush1.msra.mxu0 0.0
  %55 = vmatprep.subr.mxu0 0.0
  %56 = vmatpush1.msra.mxu0 0.0
  %57 = vmatprep.subr.mxu0 0.0
  %58 = vmatpush1.msra.mxu0 0.0
  %59 = vmatprep.subr.mxu0 0.0
  %60 = vmatpush1.msra.mxu0 0.0
  %61 = vmatprep.subr.mxu0 0.0
  %62 = vmatpush1.msra.mxu0 0.0
  %63 = vmatprep.subr.mxu0 0.0
  %64 = vmatpush1.msra.mxu0 0.0
  %65 = vmatprep.subr.mxu0 0.0
  %66 = vmatpush1.msra.mxu0 0.0
  %67 = vmatprep.subr.mxu0 0.0
  %68 = vmatpush1.msra.mxu0 %v35
  %69 = vmatprep.subr.mxu0 0.0
  %70 = vmatpush2.msra.mxu0 0.0
  %71 = vmatprep.subr.mxu0 0.0
  %72 = vmatpush2.msra.mxu0 0.0
  %73 = vmatprep.subr.mxu0 0.0
  %74 = vmatpush2.msra.mxu0 0.0
  %75 = vmatprep.subr.mxu0 0.0
  %76 = vmatpush2.msra.mxu0 0.0
  %77 = vmatprep.subr.mxu0 0.0
  %78 = vmatpush2.msra.mxu0 0.0
  %79 = vmatprep.subr.mxu0 0.0
  %80 = vmatpush2.msra.mxu0 0.0
  %81 = vmatprep.subr.mxu0 0.0
  %82 = vmatpush2.msra.mxu0 0.0
  %83 = vmatprep.subr.mxu0 0.0
  %84 = vmatpush2.msra.mxu0 0.0
  %85 = vmatprep.subr.mxu0 0.0
  %86 = vmatpush2.msra.mxu0 0.0
  %87 = vmatprep.subr.mxu0 0.0
  %88 = vmatpush2.msra.mxu0 0.0
  %89 = vmatprep.subr.mxu0 0.0
  %90 = vmatpush2.msra.mxu0 0.0
  %91 = vmatprep.subr.mxu0 0.0
  %92 = vmatpush2.msra.mxu0 0.0
  %93 = vmatprep.subr.mxu0 0.0
  %94 = vmatpush2.msra.mxu0 0.0
  %95 = vmatprep.subr.mxu0 0.0
  %96 = vmatpush2.msra.mxu0 0.0
  %97 = vmatprep.subr.mxu0 0.0
  %98 = vmatpush2.msra.mxu0 0.0
  %99 = vmatprep.subr.mxu0 0.0
  %100 = vmatpush2.msra.mxu0 0.0
  %101 = vmatprep.mubr.f32.mxu0 0.0
  %102 = vmatmul.mubr.f32.gmra.mxu0 %v31
  %v103 = vpop.f32.mrf.mxu0
  %v104 = vadd.f32 %v27, %v103
  %v105 = vpop.f32.mrf.mxu0
  %106 = vdwg.mxu0
  %v107 = vmax.f32 %v104, 0.0
  %v108 = vld [vmem:[%s3] sm:$0xff]
  %v109 = vld [vmem:[%s3 + $0x8] sm:$0xff]
  %v110 = vld [vmem:[%s3 + $0x10] sm:$0xff]
  %v111 = vld [vmem:[%s3 + $0x18] sm:$0xff]
  %v112 = vld [vmem:[%s3 + $0x20] sm:$0xff]
  %v113 = vld [vmem:[%s3 + $0x28] sm:$0xff]
  %v114 = vld [vmem:[%s3 + $0x30] sm:$0xff]
  %v115 = vld [vmem:[%s3 + $0x38] sm:$0xff]
  %v116 = vld [vmem:[%s3 + $0x40] sm:$0xff]
  %v117 = vld [vmem:[%s3 + $0x48] sm:$0xff]
  %v118 = vld [vmem:[%s3 + $0x50] sm:$0xff]
  %v119 = vld [vmem:[%s3 + $0x58] sm:$0xff]
  %v120 = vld [vmem:[%s3 + $0x60] sm:$0xff]
  %v121 = vld [vmem:[%s3 + $0x68] sm:$0xff]
  %v122 = vld [vmem:[%s3 + $0x70] sm:$0xff]
  %v123 = vld [vmem:[%s3 + $0x78] sm:$0xff]
  %v124 = vld [vmem:[%s4] sm:$0x1]
  %v126 = vlaneseq
  %v127 = vshrl.u32 %v126, 7
  %v128 = vsub.s32 0, %v127
  %v129 = vrot.slane %v124, %v128
  %131 = vmatprep.subr.mxu0 0.0
  %132 = vmatpush1.msra.mxu0 %v123
  %133 = vmatprep.subr.mxu0 0.0
  %134 = vmatpush1.msra.mxu0 %v122
  %135 = vmatprep.subr.mxu0 0.0
  %136 = vmatpush1.msra.mxu0 %v121
  %137 = vmatprep.subr.mxu0 0.0
  %138 = vmatpush1.msra.mxu0 %v120
  %139 = vmatprep.subr.mxu0 0.0
  %140 = vmatpush1.msra.mxu0 %v119
  %141 = vmatprep.subr.mxu0 0.0
  %142 = vmatpush1.msra.mxu0 %v118
  %143 = vmatprep.subr.mxu0 0.0
  %144 = vmatpush1.msra.mxu0 %v117
  %145 = vmatprep.subr.mxu0 0.0
  %146 = vmatpush1.msra.mxu0 %v116
  %147 = vmatprep.subr.mxu0 0.0
  %148 = vmatpush1.msra.mxu0 %v115
  %149 = vmatprep.subr.mxu0 0.0
  %150 = vmatpush1.msra.mxu0 %v114
  %151 = vmatprep.subr.mxu0 0.0
  %152 = vmatpush1.msra.mxu0 %v113
  %153 = vmatprep.subr.mxu0 0.0
  %154 = vmatpush1.msra.mxu0 %v112
  %155 = vmatprep.subr.mxu0 0.0
  %156 = vmatpush1.msra.mxu0 %v111
  %157 = vmatprep.subr.mxu0 0.0
  %158 = vmatpush1.msra.mxu0 %v110
  %159 = vmatprep.subr.mxu0 0.0
  %160 = vmatpush1.msra.mxu0 %v109
  %161 = vmatprep.subr.mxu0 0.0
  %162 = vmatpush1.msra.mxu0 %v108
  %163 = vmatprep.subr.mxu0 0.0
  %164 = vmatpush2.msra.mxu0 0.0
  %165 = vmatprep.subr.mxu0 0.0
  %166 = vmatpush2.msra.mxu0 0.0
  %167 = vmatprep.subr.mxu0 0.0
  %168 = vmatpush2.msra.mxu0 0.0
  %169 = vmatprep.subr.mxu0 0.0
  %170 = vmatpush2.msra.mxu0 0.0
  %171 = vmatprep.subr.mxu0 0.0
  %172 = vmatpush2.msra.mxu0 0.0
  %173 = vmatprep.subr.mxu0 0.0
  %174 = vmatpush2.msra.mxu0 0.0
  %175 = vmatprep.subr.mxu0 0.0
  %176 = vmatpush2.msra.mxu0 0.0
  %177 = vmatprep.subr.mxu0 0.0
  %178 = vmatpush2.msra.mxu0 0.0
  %179 = vmatprep.subr.mxu0 0.0
  %180 = vmatpush2.msra.mxu0 0.0
  %181 = vmatprep.subr.mxu0 0.0
  %182 = vmatpush2.msra.mxu0 0.0
  %183 = vmatprep.subr.mxu0 0.0
  %184 = vmatpush2.msra.mxu0 0.0
  %185 = vmatprep.subr.mxu0 0.0
  %186 = vmatpush2.msra.mxu0 0.0
  %187 = vmatprep.subr.mxu0 0.0
  %188 = vmatpush2.msra.mxu0 0.0
  %189 = vmatprep.subr.mxu0 0.0
  %190 = vmatpush2.msra.mxu0 0.0
  %191 = vmatprep.subr.mxu0 0.0
  %192 = vmatpush2.msra.mxu0 0.0
  %193 = vmatprep.subr.mxu0 0.0
  %194 = vmatpush2.msra.mxu0 0.0
  %195 = vmatprep.mubr.f32.mxu0 0.0
  %196 = vmatmul.mubr.f32.gmra.mxu0 %v107
  %v197 = vpop.f32.mrf.mxu0
  %v198 = vadd.f32 %v129, %v197
  %v199 = vpop.f32.mrf.mxu0
  %200 = vdwg.mxu0
  %vm201 = vcmask 15360
  %202 = vst.msk [vmem:[%s5] sm:$0xff] %vm201, %v198
  // Predicated region
  $region22: #{net_forward.1} parent=0 // pred_check
    _
  $region23: #{net_forward.1} parent=0 // pred_check_branch
    %204 = sbr.rel (0) target = $region25
  $region24: #{net_forward.1} parent=0 // pred_region
    _
  $region25: #{net_forward.1} parent=0 // pred_fallthru
    _
  // Predicated region
  $region26: #{net_forward.1} parent=0 // pred_check
    _
  $region27: #{net_forward.1} parent=0 // pred_check_branch
    %206 = sbr.rel (0) target = $region29
  $region28: #{net_forward.1} parent=0 // pred_region
    _
  $region29: #{net_forward.1} parent=0 // pred_fallthru
    _

</llo_original>
